<compile_context>
chip_gen: v6e
topology: v6e:2x2x1
jax: 0.10.0
libtpu: 0.0.40
codegen_flags: <defaults>
</compile_context>

<pallas_src>
import functools

import jax
import jax.numpy as jnp
from jax import lax
from jax.experimental import pallas as pl
from jax.experimental.pallas import tpu as pltpu


def _silu(h):
    # SiLU via tanh: sigmoid(x) = 0.5 + 0.5*tanh(0.5*x) -> single EUP push per
    # element instead of exp + full-precision divide.
    return h * (0.5 + 0.5 * jnp.tanh(0.5 * h))


def _custom_nn_kernel(num_hidden, n_in, chunk, xT_ref, mu_ref, inv_s2_ref, *refs):
    """One batch tile of the forward pass (batch on lanes), strip-mined over
    `chunk`-lane sub-chunks to bound vreg live ranges.

    refs = (W0, b0, W1, b1, ..., W_{L-1}, b_{L-1}, W_out, b_out, out_ref)
    Weights are in torch layout [out_features, in_features]; biases / mu /
    inv_sigma^2 are [features, 1] columns so they broadcast across lanes (batch).
    """
    out_ref = refs[-1]
    params = refs[:-1]
    tb = xT_ref.shape[-1]
    n_chunks = tb // chunk

    def one_chunk(c, carry):
        off = pl.multiple_of(c * chunk, chunk)
        xT = xT_ref[:, pl.ds(off, chunk)]            # [n_in, chunk]
        inputx = xT[0:1, :]                          # [1, chunk]  == x[:, 0]

        # ---- first linear + Gaussian RBF gate (the i == 0 branch) ----
        w0 = params[0][...]                          # [h0, n_in]
        b0 = params[1][...]                          # [h0, 1]
        if n_in <= 8:
            # K = n_in is tiny: two broadcast-FMAs on the otherwise idle VPU
            # beat a ~98%-padding contraction on the MXU.
            h = w0[:, 0:1] * inputx + b0             # [h0, chunk]
            for j in range(1, n_in):
                h = h + w0[:, j:j + 1] * xT[j:j + 1, :]
        else:
            h = jnp.dot(w0, xT, preferred_element_type=jnp.float32) + b0

        d = inputx - mu_ref[...]                     # [h0, chunk]
        h = h * jnp.exp(-(d * d) * inv_s2_ref[...])  # gate (lane-dense EUP exp)

        # ---- remaining hidden linears, each preceded by SiLU ----
        idx = 2
        for _ in range(num_hidden - 1):
            h = _silu(h)
            w = params[idx][...]                     # [h_next, h_prev]
            b = params[idx + 1][...]                 # [h_next, 1]
            h = jnp.dot(w, h, preferred_element_type=jnp.float32) + b
            idx += 2

        # ---- final activation + output projection ----
        h = _silu(h)
        w_out = params[idx][...]                     # [n_out, h_last]
        b_out = params[idx + 1][...]                 # [n_out, 1]
        out_ref[:, pl.ds(off, chunk)] = (
            jnp.dot(w_out, h, preferred_element_type=jnp.float32) + b_out)
        return carry

    lax.fori_loop(0, n_chunks, one_chunk, 0, unroll=True)


def prepare_params(mu, sigma, weights, biases, w_out, b_out):
    """One-time conversion of the torch-style parameters into kernel layout.

    Call this at init (or under a cached jit), NOT on every forward call — the
    transposes/reshapes are separate un-hidden XLA ops otherwise.
    """
    flat = []
    for w, b in zip(weights, biases):
        flat.append(jnp.asarray(w, jnp.float32).T)                 # [out, in]
        flat.append(jnp.asarray(b, jnp.float32).reshape(-1, 1))    # [out, 1]
    flat.append(jnp.asarray(w_out, jnp.float32).T)                 # [n_out, h_last]
    flat.append(jnp.asarray(b_out, jnp.float32).reshape(-1, 1))    # [n_out, 1]
    mu_col = jnp.asarray(mu, jnp.float32).reshape(-1, 1)           # [h0, 1]
    inv_s2_col = 1.0 / (jnp.asarray(sigma, jnp.float32).reshape(-1, 1) ** 2)
    return (mu_col, inv_s2_col, tuple(flat), len(weights))


def _pick_batch_tile(B, tb_req, chunk):
    """Large lane-dense batch tile: a multiple of the strip-mine chunk, no larger
    than the (rounded-up) batch, with a best-effort even grid split so both
    v7x TensorCores get the same number of tiles."""
    tb = max(chunk, (tb_req // chunk) * chunk)
    tb = min(tb, pl.cdiv(B, chunk) * chunk)
    n = pl.cdiv(B, tb)
    if n > 1 and n % 2 == 1:
        cand = pl.cdiv(pl.cdiv(B, n + 1), chunk) * chunk
        if cand >= chunk and pl.cdiv(B, cand) % 2 == 0:
            tb = cand
    return tb


def custom_nn_forward(x, prepared, *, tb=2048, chunk=512):
    """x: [B, n_in]; prepared: output of prepare_params. Returns [B, n_out]."""
    mu_col, inv_s2_col, flat_params, num_hidden = prepared
    B, n_in = x.shape
    n_out = flat_params[-1].shape[0]
    assert chunk % 128 == 0, "chunk must be lane-dense (multiple of 128)"

    tb = _pick_batch_tile(B, tb, chunk)
    grid = (pl.cdiv(B, tb),)

    # Only the tiny [B, n_in] -> [n_in, B] transpose; NO batch padding — Pallas
    # handles the ragged last block (OOB output lanes are masked on writeback,
    # and the network is lane-independent so garbage lanes never leak).
    xT = jnp.asarray(x, jnp.float32).T

    args = (xT, mu_col, inv_s2_col, *flat_params)

    # x^T / out are tiled along batch; params use constant block indices so they
    # are DMA'd to VMEM once and stay resident across the whole grid.
    in_specs = [pl.BlockSpec((n_in, tb), lambda i: (0, i))]
    for a in args[1:]:
        in_specs.append(pl.BlockSpec(a.shape, lambda i: (0, 0)))
    out_spec = pl.BlockSpec((n_out, tb), lambda i: (0, i))

    kernel = functools.partial(_custom_nn_kernel, num_hidden, n_in, chunk)

    yT = pl.pallas_call(
        kernel,
        out_shape=jax.ShapeDtypeStruct((n_out, B), jnp.float32),
        grid=grid,
        in_specs=in_specs,
        out_specs=out_spec,
        compiler_params=pltpu.CompilerParams(
            dimension_semantics=("parallel",),        # dual-TC sharding on v7x
            vmem_limit_bytes=32 * 1024 * 1024),       # safe on v5e/v6e/v7x
    )(*args)

    # n_out is 1, so this is effectively a free reshape back to [B, n_out].
    return yT.T


def custom_nn_reference(x, mu, sigma, weights, biases, w_out, b_out):
    """Pure-JAX reference of the PyTorch forward for verification."""
    inputx = x[:, 0:1]
    h = x @ weights[0] + biases[0]
    h = h * jnp.exp(-((inputx - mu) ** 2) / (sigma ** 2))
    for w, b in zip(weights[1:], biases[1:]):
        h = jax.nn.silu(h)
        h = h @ w + b
    h = jax.nn.silu(h)
    return h @ w_out + b_out


def init_params(key, n_input_units, hidden_units, n_output_units):
    """Deterministic parameter init (Kaiming-uniform-ish, like torch.nn.Linear)."""
    weights, biases = [], []
    dims = [n_input_units] + list(hidden_units)
    for i in range(len(hidden_units)):
        key, kw, kb = jax.random.split(key, 3)
        bound = 1.0 / jnp.sqrt(dims[i])
        weights.append(jax.random.uniform(kw, (dims[i], dims[i + 1]),
                                          jnp.float32, -bound, bound))
        biases.append(jax.random.uniform(kb, (dims[i + 1],),
                                         jnp.float32, -bound, bound))
    key, kw, kb = jax.random.split(key, 3)
    bound = 1.0 / jnp.sqrt(hidden_units[-1])
    w_out = jax.random.uniform(kw, (hidden_units[-1], n_output_units),
                               jnp.float32, -bound, bound)
    b_out = jax.random.uniform(kb, (n_output_units,), jnp.float32, -bound, bound)

    # mu = linspace(0, 1, h0) (buffer), sigma = ones(h0) * 0.1 (parameter)
    mu = jnp.linspace(0.0, 1.0, hidden_units[0], dtype=jnp.float32)
    sigma = jnp.ones((hidden_units[0],), jnp.float32) * 0.1
    return mu, sigma, weights, biases, w_out, b_out


if __name__ == "__main__":
    # Shapes consistent with the module: 2 inputs (e.g. scale factor & k),
    # two hidden layers of 32 units, 1 output.
    n_input_units = 2
    hidden_units = [32, 32]
    n_output_units = 1

    key = jax.random.PRNGKey(0)
    mu, sigma, weights, biases, w_out, b_out = init_params(
        key, n_input_units, hidden_units, n_output_units)

    # Parameters are packed into the kernel layout ONCE (not per forward call).
    prepared = prepare_params(mu, sigma, weights, biases, w_out, b_out)

    # Small primary check (batch=8, single tile, single chunk) ...
    key, kx = jax.random.split(key)
    x_small = jax.random.uniform(kx, (8, n_input_units), jnp.float32)
    y_small = jax.block_until_ready(custom_nn_forward(x_small, prepared))
    y_small_ref = custom_nn_reference(x_small, mu, sigma, weights, biases, w_out, b_out)
    assert y_small.shape == (8, n_output_units)
    assert jnp.allclose(y_small, y_small_ref, atol=1e-4, rtol=1e-4)

    # ... plus a multi-tile check (batch=5000 -> even grid split, ragged last block).
    key, kx = jax.random.split(key)
    x_big = jax.random.uniform(kx, (5000, n_input_units), jnp.float32)
    y_big = jax.block_until_ready(custom_nn_forward(x_big, prepared))
    y_big_ref = custom_nn_reference(x_big, mu, sigma, weights, biases, w_out, b_out)
    assert y_big.shape == (5000, n_output_units)
    assert jnp.allclose(y_big, y_big_ref, atol=1e-4, rtol=1e-4)

    print("KERNEL_OK")
</pallas_src>

<mosaic_0001>
module attributes {stable_mosaic.version = 11 : i64} {
  func.func @_custom_nn_kernel(%arg0: i32, %arg1: memref<2x512xf32, #tpu.memory_space<vmem>>, %arg2: memref<32x1xf32, #tpu.memory_space<vmem>>, %arg3: memref<32x1xf32, #tpu.memory_space<vmem>>, %arg4: memref<32x2xf32, #tpu.memory_space<vmem>>, %arg5: memref<32x1xf32, #tpu.memory_space<vmem>>, %arg6: memref<32x32xf32, #tpu.memory_space<vmem>>, %arg7: memref<32x1xf32, #tpu.memory_space<vmem>>, %arg8: memref<1x32xf32, #tpu.memory_space<vmem>>, %arg9: memref<1x1xf32, #tpu.memory_space<vmem>>, %arg10: memref<1x512xf32, #tpu.memory_space<vmem>>) attributes {dimension_semantics = [#tpu.dimension_semantics<parallel>], iteration_bounds = array<i64: 1>, scalar_prefetch = 0 : i64, scratch_operands = 0 : i64, tpu.core_type = #tpu.core_type<tc>, window_params = [{transform_indices = @transform_0, window_bounds = array<i64: 2, 512>}, {pipeline_mode = #tpu.pipeline_mode<synchronous>, transform_indices = @transform_1, window_bounds = array<i64: 32, 1>}, {pipeline_mode = #tpu.pipeline_mode<synchronous>, transform_indices = @transform_2, window_bounds = array<i64: 32, 1>}, {pipeline_mode = #tpu.pipeline_mode<synchronous>, transform_indices = @transform_3, window_bounds = array<i64: 32, 2>}, {pipeline_mode = #tpu.pipeline_mode<synchronous>, transform_indices = @transform_4, window_bounds = array<i64: 32, 1>}, {pipeline_mode = #tpu.pipeline_mode<synchronous>, transform_indices = @transform_5, window_bounds = array<i64: 32, 32>}, {pipeline_mode = #tpu.pipeline_mode<synchronous>, transform_indices = @transform_6, window_bounds = array<i64: 32, 1>}, {pipeline_mode = #tpu.pipeline_mode<synchronous>, transform_indices = @transform_7, window_bounds = array<i64: 1, 32>}, {pipeline_mode = #tpu.pipeline_mode<synchronous>, transform_indices = @transform_8, window_bounds = array<i64: 1, 1>}, {transform_indices = @transform_9, window_bounds = array<i64: 1, 512>}]} {
    %c0_i32 = arith.constant 0 : i32
    %c512_i32 = arith.constant 512 : i32
    %0 = arith.muli %c0_i32, %c512_i32 : i32
    %1 = tpu.assume_multiple %0, 512 : i32
    %c0 = arith.constant 0 : index
    %2 = arith.index_cast %1 : i32 to index
    %3 = vector.load %arg1[%c0, %2] : memref<2x512xf32, #tpu.memory_space<vmem>>, vector<2x512xf32>
    %4 = vector.extract_strided_slice %3 {offsets = [0, 0], sizes = [1, 512], strides = [1, 1]} : vector<2x512xf32> to vector<1x512xf32>
    %c0_0 = arith.constant 0 : index
    %c0_1 = arith.constant 0 : index
    %5 = vector.load %arg4[%c0_0, %c0_1] : memref<32x2xf32, #tpu.memory_space<vmem>>, vector<32x2xf32>
    %c0_2 = arith.constant 0 : index
    %c0_3 = arith.constant 0 : index
    %6 = vector.load %arg5[%c0_2, %c0_3] : memref<32x1xf32, #tpu.memory_space<vmem>>, vector<32x1xf32>
    %7 = vector.extract_strided_slice %5 {offsets = [0, 0], sizes = [32, 1], strides = [1, 1]} : vector<32x2xf32> to vector<32x1xf32>
    %8 = vector.broadcast %7 : vector<32x1xf32> to vector<32x512xf32>
    %9 = vector.broadcast %4 : vector<1x512xf32> to vector<32x512xf32>
    %10 = arith.mulf %8, %9 : vector<32x512xf32>
    %11 = vector.broadcast %6 : vector<32x1xf32> to vector<32x512xf32>
    %12 = arith.addf %10, %11 : vector<32x512xf32>
    %13 = vector.extract_strided_slice %5 {offsets = [0, 1], sizes = [32, 1], strides = [1, 1]} : vector<32x2xf32> to vector<32x1xf32>
    %14 = vector.extract_strided_slice %3 {offsets = [1, 0], sizes = [1, 512], strides = [1, 1]} : vector<2x512xf32> to vector<1x512xf32>
    %15 = vector.broadcast %13 : vector<32x1xf32> to vector<32x512xf32>
    %16 = vector.broadcast %14 : vector<1x512xf32> to vector<32x512xf32>
    %17 = arith.mulf %15, %16 : vector<32x512xf32>
    %18 = arith.addf %12, %17 : vector<32x512xf32>
    %c0_4 = arith.constant 0 : index
    %c0_5 = arith.constant 0 : index
    %19 = vector.load %arg2[%c0_4, %c0_5] : memref<32x1xf32, #tpu.memory_space<vmem>>, vector<32x1xf32>
    %20 = vector.broadcast %4 : vector<1x512xf32> to vector<32x512xf32>
    %21 = vector.broadcast %19 : vector<32x1xf32> to vector<32x512xf32>
    %22 = arith.subf %20, %21 : vector<32x512xf32>
    %23 = arith.mulf %22, %22 : vector<32x512xf32>
    %cst = arith.constant 0.000000e+00 : f32
    %24 = vector.broadcast %cst : f32 to vector<32x512xf32>
    %25 = arith.subf %24, %23 : vector<32x512xf32>
    %c0_6 = arith.constant 0 : index
    %c0_7 = arith.constant 0 : index
    %26 = vector.load %arg3[%c0_6, %c0_7] : memref<32x1xf32, #tpu.memory_space<vmem>>, vector<32x1xf32>
    %27 = vector.broadcast %26 : vector<32x1xf32> to vector<32x512xf32>
    %28 = arith.mulf %25, %27 : vector<32x512xf32>
    %29 = math.exp %28 : vector<32x512xf32>
    %30 = arith.mulf %18, %29 : vector<32x512xf32>
    %cst_8 = arith.constant 5.000000e-01 : f32
    %31 = vector.broadcast %cst_8 : f32 to vector<32x512xf32>
    %32 = arith.mulf %31, %30 : vector<32x512xf32>
    %33 = math.tanh %32 : vector<32x512xf32>
    %cst_9 = arith.constant 5.000000e-01 : f32
    %34 = vector.broadcast %cst_9 : f32 to vector<32x512xf32>
    %35 = arith.mulf %34, %33 : vector<32x512xf32>
    %cst_10 = arith.constant 5.000000e-01 : f32
    %36 = vector.broadcast %cst_10 : f32 to vector<32x512xf32>
    %37 = arith.addf %36, %35 : vector<32x512xf32>
    %38 = arith.mulf %30, %37 : vector<32x512xf32>
    %c0_11 = arith.constant 0 : index
    %c0_12 = arith.constant 0 : index
    %39 = vector.load %arg6[%c0_11, %c0_12] : memref<32x32xf32, #tpu.memory_space<vmem>>, vector<32x32xf32>
    %c0_13 = arith.constant 0 : index
    %c0_14 = arith.constant 0 : index
    %40 = vector.load %arg7[%c0_13, %c0_14] : memref<32x1xf32, #tpu.memory_space<vmem>>, vector<32x1xf32>
    %cst_15 = arith.constant dense<0.000000e+00> : vector<32x512xf32>
    %41 = tpu.matmul %39, %38, %cst_15 {dimension_numbers = #tpu.dot_dimension_numbers<[1], [0], [0], [1], [0, 0, 1, 1], [], []>} : vector<32x32xf32>, vector<32x512xf32>, vector<32x512xf32> -> vector<32x512xf32>
    %42 = vector.broadcast %40 : vector<32x1xf32> to vector<32x512xf32>
    %43 = arith.addf %41, %42 : vector<32x512xf32>
    %cst_16 = arith.constant 5.000000e-01 : f32
    %44 = vector.broadcast %cst_16 : f32 to vector<32x512xf32>
    %45 = arith.mulf %44, %43 : vector<32x512xf32>
    %46 = math.tanh %45 : vector<32x512xf32>
    %cst_17 = arith.constant 5.000000e-01 : f32
    %47 = vector.broadcast %cst_17 : f32 to vector<32x512xf32>
    %48 = arith.mulf %47, %46 : vector<32x512xf32>
    %cst_18 = arith.constant 5.000000e-01 : f32
    %49 = vector.broadcast %cst_18 : f32 to vector<32x512xf32>
    %50 = arith.addf %49, %48 : vector<32x512xf32>
    %51 = arith.mulf %43, %50 : vector<32x512xf32>
    %c0_19 = arith.constant 0 : index
    %c0_20 = arith.constant 0 : index
    %52 = vector.load %arg8[%c0_19, %c0_20] : memref<1x32xf32, #tpu.memory_space<vmem>>, vector<1x32xf32>
    %c0_21 = arith.constant 0 : index
    %c0_22 = arith.constant 0 : index
    %53 = vector.load %arg9[%c0_21, %c0_22] : memref<1x1xf32, #tpu.memory_space<vmem>>, vector<1x1xf32>
    %cst_23 = arith.constant dense<0.000000e+00> : vector<1x512xf32>
    %54 = tpu.matmul %52, %51, %cst_23 {dimension_numbers = #tpu.dot_dimension_numbers<[1], [0], [0], [1], [0, 0, 1, 1], [], []>} : vector<1x32xf32>, vector<32x512xf32>, vector<1x512xf32> -> vector<1x512xf32>
    %55 = vector.broadcast %53 : vector<1x1xf32> to vector<1x512xf32>
    %56 = arith.addf %54, %55 : vector<1x512xf32>
    %c0_24 = arith.constant 0 : index
    %57 = arith.index_cast %1 : i32 to index
    %58 = vector.load %arg10[%c0_24, %57] : memref<1x512xf32, #tpu.memory_space<vmem>>, vector<1x512xf32>
    tpu.vector_store %arg10[%c0_24, %57], %56 {strides = array<i32>} : memref<1x512xf32, #tpu.memory_space<vmem>>, vector<1x512xf32>,
    %c1_i32 = arith.constant 1 : i32
    return
  }
  func.func @transform_0(%arg0: i32) -> (i32, i32) {
    %c0_i32 = arith.constant 0 : i32
    %c0_i32_0 = arith.constant 0 : i32
    return %c0_i32, %arg0 : i32, i32
  }
  func.func @transform_1(%arg0: i32) -> (i32, i32) {
    %c0_i32 = arith.constant 0 : i32
    %c0_i32_0 = arith.constant 0 : i32
    %c0_i32_1 = arith.constant 0 : i32
    return %c0_i32, %c0_i32_0 : i32, i32
  }
  func.func @transform_2(%arg0: i32) -> (i32, i32) {
    %c0_i32 = arith.constant 0 : i32
    %c0_i32_0 = arith.constant 0 : i32
    %c0_i32_1 = arith.constant 0 : i32
    return %c0_i32, %c0_i32_0 : i32, i32
  }
  func.func @transform_3(%arg0: i32) -> (i32, i32) {
    %c0_i32 = arith.constant 0 : i32
    %c0_i32_0 = arith.constant 0 : i32
    %c0_i32_1 = arith.constant 0 : i32
    return %c0_i32, %c0_i32_0 : i32, i32
  }
  func.func @transform_4(%arg0: i32) -> (i32, i32) {
    %c0_i32 = arith.constant 0 : i32
    %c0_i32_0 = arith.constant 0 : i32
    %c0_i32_1 = arith.constant 0 : i32
    return %c0_i32, %c0_i32_0 : i32, i32
  }
  func.func @transform_5(%arg0: i32) -> (i32, i32) {
    %c0_i32 = arith.constant 0 : i32
    %c0_i32_0 = arith.constant 0 : i32
    %c0_i32_1 = arith.constant 0 : i32
    return %c0_i32, %c0_i32_0 : i32, i32
  }
  func.func @transform_6(%arg0: i32) -> (i32, i32) {
    %c0_i32 = arith.constant 0 : i32
    %c0_i32_0 = arith.constant 0 : i32
    %c0_i32_1 = arith.constant 0 : i32
    return %c0_i32, %c0_i32_0 : i32, i32
  }
  func.func @transform_7(%arg0: i32) -> (i32, i32) {
    %c0_i32 = arith.constant 0 : i32
    %c0_i32_0 = arith.constant 0 : i32
    %c0_i32_1 = arith.constant 0 : i32
    return %c0_i32, %c0_i32_0 : i32, i32
  }
  func.func @transform_8(%arg0: i32) -> (i32, i32) {
    %c0_i32 = arith.constant 0 : i32
    %c0_i32_0 = arith.constant 0 : i32
    %c0_i32_1 = arith.constant 0 : i32
    return %c0_i32, %c0_i32_0 : i32, i32
  }
  func.func @transform_9(%arg0: i32) -> (i32, i32) {
    %c0_i32 = arith.constant 0 : i32
    %c0_i32_0 = arith.constant 0 : i32
    return %c0_i32, %arg0 : i32, i32
  }
}

</mosaic_0001>

<llo_original>
// kernel: tpu_custom_call.1
$region0: #{tpu_custom_call.1}
  #allocation0 [shape = 'u32[]', space=smem, size = 0x4, offset = 0x4, fixed_abs, tag = 'smem constant byte address 0x4 - core index']
  #allocation1 [shape = 'u32[144,128]{1,0:T(1,128)}', space=vmem, size = 0x12000, scoped, tag = 'internal scratch']
  #allocation2 [shape = 'f32[1,1]{1,0:T(1,128)S(1)}', space=vmem, size = 0x200, scoped, tag = 'scoped memory for tpu_custom_call.1']
  %s0 = inlined_call_operand.vmem [shape: f32[2,8], index: 0, kind: input, shape index: {}]
  %s1 = inlined_call_operand.vmem [shape: f32[32,1], index: 1, kind: input, shape index: {}]
  %s2 = inlined_call_operand.vmem [shape: f32[32,1], index: 2, kind: input, shape index: {}]
  %s3 = inlined_call_operand.vmem [shape: f32[32,2], index: 3, kind: input, shape index: {}]
  %s4 = inlined_call_operand.vmem [shape: f32[32,1], index: 4, kind: input, shape index: {}]
  %s5 = inlined_call_operand.vmem [shape: f32[32,32], index: 5, kind: input, shape index: {}]
  %s6 = inlined_call_operand.vmem [shape: f32[32,1], index: 6, kind: input, shape index: {}]
  %s7 = inlined_call_operand.vmem [shape: f32[1,32], index: 7, kind: input, shape index: {}]
  %s8 = inlined_call_operand.<no memory space> [shape: f32[1,1], index: 8, kind: input, shape index: {}]
  %s9 = inlined_call_operand.hbm [shape: f32[1,8], index: 9, kind: output, shape index: {}]
  %s10 = sld [smem:[#allocation0]]
  $region46: #{tpu_custom_call.1} parent=0
    _
  %s12 = ssub.s32 1, %s10
  %s13 = scalar_select 0, %s12, %s10
  %v14 = vstv %s8
  %15 = vst [vmem:[#allocation2] sm:$0x1] %v14
  $region1: #{tpu_custom_call.1} parent=0
    #allocation3 [shape = 'u8[2048]{0}', space=vmem, size = 0x800, scoped, tag = 'output window, operand 0, single buffered']
    #allocation4 [shape = 's32[1]{0}', space=sflag, size = 0x4, scoped, tag = 'scoped memory for tpu_custom_call.1']
    %16 = vsyncpa [#allocation4], 0
    // Predicated region
    $region2: #{tpu_custom_call.1} parent=1 // pred_check
      _
    $region3: #{tpu_custom_call.1} parent=1 // pred_check_branch
      %18 = sbr.rel (0) target = $region5
    $region4: #{tpu_custom_call.1} parent=1 // pred_region
      _
    $region5: #{tpu_custom_call.1} parent=1 // pred_fallthru
      _
    // Predicated region
    $region6: #{tpu_custom_call.1} parent=1 // pred_check
      _
    $region7: #{tpu_custom_call.1} parent=1 // pred_check_branch
      %20 = sbr.rel (0) target = $region9
    $region8: #{tpu_custom_call.1} parent=1 // pred_region
      _
    $region9: #{tpu_custom_call.1} parent=1 // pred_fallthru
      _
    // Predicated region
    $region10: #{tpu_custom_call.1} parent=1 // pred_check
      _
    $region11: #{tpu_custom_call.1} parent=1 // pred_check_branch
      %22 = sbr.rel (0) target = $region13
    $region12: #{tpu_custom_call.1} parent=1 // pred_region
      _
    $region13: #{tpu_custom_call.1} parent=1 // pred_fallthru
      _
    // Predicated region
    $region14: #{tpu_custom_call.1} parent=1 // pred_check
      _
    $region15: #{tpu_custom_call.1} parent=1 // pred_check_branch
      %24 = sbr.rel (0) target = $region17
    $region16: #{tpu_custom_call.1} parent=1 // pred_region
      _
    $region17: #{tpu_custom_call.1} parent=1 // pred_fallthru
      _
    // Predicated region
    $region18: #{tpu_custom_call.1} parent=1 // pred_check
      _
    $region19: #{tpu_custom_call.1} parent=1 // pred_check_branch
      %26 = sbr.rel (0) target = $region21
    $region20: #{tpu_custom_call.1} parent=1 // pred_region
      _
    $region21: #{tpu_custom_call.1} parent=1 // pred_fallthru
      _
    // Predicated region
    $region22: #{tpu_custom_call.1} parent=1 // pred_check
      _
    $region23: #{tpu_custom_call.1} parent=1 // pred_check_branch
      %28 = sbr.rel (0) target = $region25
    $region24: #{tpu_custom_call.1} parent=1 // pred_region
      _
    $region25: #{tpu_custom_call.1} parent=1 // pred_fallthru
      _
    // Predicated region
    $region26: #{tpu_custom_call.1} parent=1 // pred_check
      _
    $region27: #{tpu_custom_call.1} parent=1 // pred_check_branch
      %30 = sbr.rel (0) target = $region29
    $region28: #{tpu_custom_call.1} parent=1 // pred_region
      _
    $region29: #{tpu_custom_call.1} parent=1 // pred_fallthru
      _
    // Predicated region
    $region30: #{tpu_custom_call.1} parent=1 // pred_check
      _
    $region31: #{tpu_custom_call.1} parent=1 // pred_check_branch
      %32 = sbr.rel (0) target = $region33
    $region32: #{tpu_custom_call.1} parent=1 // pred_region
      _
    $region33: #{tpu_custom_call.1} parent=1 // pred_fallthru
      _
    // Predicated region
    $region34: #{tpu_custom_call.1} parent=1 // pred_check
      _
    $region35: #{tpu_custom_call.1} parent=1 // pred_check_branch
      %34 = sbr.rel (0) target = $region37
    $region36: #{tpu_custom_call.1} parent=1 // pred_region
      _
    $region37: #{tpu_custom_call.1} parent=1 // pred_fallthru
      _
    %v35 = vld [vmem:[%s0] sm:$0xff]
    %v36 = vld [vmem:[%s3] sm:$0xff]
    %v37 = vld [vmem:[%s3 + $0x8] sm:$0xff]
    %v38 = vld [vmem:[%s3 + $0x10] sm:$0xff]
    %v39 = vld [vmem:[%s3 + $0x18] sm:$0xff]
    %v40 = vld [vmem:[%s4] sm:$0xff]
    %v41 = vld [vmem:[%s4 + $0x8] sm:$0xff]
    %v42 = vld [vmem:[%s4 + $0x10] sm:$0xff]
    %v43 = vld [vmem:[%s4 + $0x18] sm:$0xff]
    %45 = vset.pattern.permute.xlu0 0
    %46 = vperm.xlu0 %45, %v36
    %v47 = vpop.permute.xlu0 %46
    %50 = vset.pattern.permute.xlu0 0
    %51 = vperm.xlu0 %50, %v37
    %v52 = vpop.permute.xlu0 %51
    %55 = vset.pattern.permute.xlu0 0
    %56 = vperm.xlu0 %55, %v38
    %v57 = vpop.permute.xlu0 %56
    %60 = vset.pattern.permute.xlu0 0
    %61 = vperm.xlu0 %60, %v39
    %v62 = vpop.permute.xlu0 %61
    %v65 = vlaneseq
    %v66 = vshrl.u32 %v65, 7
    %v67 = vsub.s32 0, %v66
    %v68 = vrot.slane %v35, %v67
    %v69 = vlaneseq
    %v70 = vshrl.u32 %v69, 7
    %v71 = vsub.s32 2, %v70
    %v72 = vrot.slane %v35, %v71
    %v73 = vlaneseq
    %v74 = vshrl.u32 %v73, 7
    %v75 = vsub.s32 4, %v74
    %v76 = vrot.slane %v35, %v75
    %v77 = vlaneseq
    %v78 = vshrl.u32 %v77, 7
    %v79 = vsub.s32 6, %v78
    %v80 = vrot.slane %v35, %v79
    %v85 = vlaneseq
    %v86 = vshrl.u32 %v85, 7
    %v87 = vsub.s32 0, %v86
    %v88 = vrot.slane %v68, %v87
    %v89 = vlaneseq
    %v90 = vshrl.u32 %v89, 7
    %v91 = vsub.s32 0, %v90
    %v92 = vrot.slane %v72, %v91
    %v93 = vlaneseq
    %v94 = vshrl.u32 %v93, 7
    %v95 = vsub.s32 0, %v94
    %v96 = vrot.slane %v76, %v95
    %v97 = vlaneseq
    %v98 = vshrl.u32 %v97, 7
    %v99 = vsub.s32 0, %v98
    %v100 = vrot.slane %v80, %v99
    %v101 = vmul.f32 %v47, %v88
    %v102 = vmul.f32 %v47, %v92
    %v103 = vmul.f32 %v47, %v96
    %v104 = vmul.f32 %v47, %v100
    %v105 = vmul.f32 %v52, %v88
    %v106 = vmul.f32 %v52, %v92
    %v107 = vmul.f32 %v52, %v96
    %v108 = vmul.f32 %v52, %v100
    %v109 = vmul.f32 %v57, %v88
    %v110 = vmul.f32 %v57, %v92
    %v111 = vmul.f32 %v57, %v96
    %v112 = vmul.f32 %v57, %v100
    %v113 = vmul.f32 %v62, %v88
    %v114 = vmul.f32 %v62, %v92
    %v115 = vmul.f32 %v62, %v96
    %v116 = vmul.f32 %v62, %v100
    %118 = vset.pattern.permute.xlu0 0
    %119 = vperm.xlu0 %118, %v40
    %v120 = vpop.permute.xlu0 %119
    %123 = vset.pattern.permute.xlu0 0
    %124 = vperm.xlu0 %123, %v41
    %v125 = vpop.permute.xlu0 %124
    %128 = vset.pattern.permute.xlu0 0
    %129 = vperm.xlu0 %128, %v42
    %v130 = vpop.permute.xlu0 %129
    %133 = vset.pattern.permute.xlu0 0
    %134 = vperm.xlu0 %133, %v43
    %v135 = vpop.permute.xlu0 %134
    %v137 = vadd.f32 %v101, %v120
    %v138 = vadd.f32 %v102, %v120
    %v139 = vadd.f32 %v103, %v120
    %v140 = vadd.f32 %v104, %v120
    %v141 = vadd.f32 %v105, %v125
    %v142 = vadd.f32 %v106, %v125
    %v143 = vadd.f32 %v107, %v125
    %v144 = vadd.f32 %v108, %v125
    %v145 = vadd.f32 %v109, %v130
    %v146 = vadd.f32 %v110, %v130
    %v147 = vadd.f32 %v111, %v130
    %v148 = vadd.f32 %v112, %v130
    %v149 = vadd.f32 %v113, %v135
    %v150 = vadd.f32 %v114, %v135
    %v151 = vadd.f32 %v115, %v135
    %v152 = vadd.f32 %v116, %v135
    %153 = vset.pattern.permute.xlu0 1
    %154 = vperm.xlu0 %153, %v36
    %v155 = vpop.permute.xlu0 %154
    %157 = vset.pattern.permute.xlu0 1
    %158 = vperm.xlu0 %157, %v37
    %v159 = vpop.permute.xlu0 %158
    %161 = vset.pattern.permute.xlu0 1
    %162 = vperm.xlu0 %161, %v38
    %v163 = vpop.permute.xlu0 %162
    %165 = vset.pattern.permute.xlu0 1
    %166 = vperm.xlu0 %165, %v39
    %v167 = vpop.permute.xlu0 %166
    %v169 = vlaneseq
    %v170 = vshrl.u32 %v169, 7
    %v171 = vsub.s32 1, %v170
    %v172 = vrot.slane %v35, %v171
    %v173 = vlaneseq
    %v174 = vshrl.u32 %v173, 7
    %v175 = vsub.s32 3, %v174
    %v176 = vrot.slane %v35, %v175
    %v177 = vlaneseq
    %v178 = vshrl.u32 %v177, 7
    %v179 = vsub.s32 5, %v178
    %v180 = vrot.slane %v35, %v179
    %v181 = vlaneseq
    %v182 = vshrl.u32 %v181, 7
    %v183 = vsub.s32 7, %v182
    %v184 = vrot.slane %v35, %v183
    %v189 = vlaneseq
    %v190 = vshrl.u32 %v189, 7
    %v191 = vsub.s32 1, %v190
    %v192 = vrot.slane %v172, %v191
    %v193 = vlaneseq
    %v194 = vshrl.u32 %v193, 7
    %v195 = vsub.s32 1, %v194
    %v196 = vrot.slane %v176, %v195
    %v197 = vlaneseq
    %v198 = vshrl.u32 %v197, 7
    %v199 = vsub.s32 1, %v198
    %v200 = vrot.slane %v180, %v199
    %v201 = vlaneseq
    %v202 = vshrl.u32 %v201, 7
    %v203 = vsub.s32 1, %v202
    %v204 = vrot.slane %v184, %v203
    %v205 = vmul.f32 %v155, %v192
    %v206 = vmul.f32 %v155, %v196
    %v207 = vmul.f32 %v155, %v200
    %v208 = vmul.f32 %v155, %v204
    %v209 = vmul.f32 %v159, %v192
    %v210 = vmul.f32 %v159, %v196
    %v211 = vmul.f32 %v159, %v200
    %v212 = vmul.f32 %v159, %v204
    %v213 = vmul.f32 %v163, %v192
    %v214 = vmul.f32 %v163, %v196
    %v215 = vmul.f32 %v163, %v200
    %v216 = vmul.f32 %v163, %v204
    %v217 = vmul.f32 %v167, %v192
    %v218 = vmul.f32 %v167, %v196
    %v219 = vmul.f32 %v167, %v200
    %v220 = vmul.f32 %v167, %v204
    %v221 = vadd.f32 %v137, %v205
    %v222 = vadd.f32 %v138, %v206
    %v223 = vadd.f32 %v139, %v207
    %v224 = vadd.f32 %v140, %v208
    %v225 = vadd.f32 %v141, %v209
    %v226 = vadd.f32 %v142, %v210
    %v227 = vadd.f32 %v143, %v211
    %v228 = vadd.f32 %v144, %v212
    %v229 = vadd.f32 %v145, %v213
    %v230 = vadd.f32 %v146, %v214
    %v231 = vadd.f32 %v147, %v215
    %v232 = vadd.f32 %v148, %v216
    %v233 = vadd.f32 %v149, %v217
    %v234 = vadd.f32 %v150, %v218
    %v235 = vadd.f32 %v151, %v219
    %v236 = vadd.f32 %v152, %v220
    %v237 = vld [vmem:[%s1] sm:$0xff]
    %v238 = vld [vmem:[%s1 + $0x8] sm:$0xff]
    %v239 = vld [vmem:[%s1 + $0x10] sm:$0xff]
    %v240 = vld [vmem:[%s1 + $0x18] sm:$0xff]
    %242 = vset.pattern.permute.xlu0 0
    %243 = vperm.xlu0 %242, %v237
    %v244 = vpop.permute.xlu0 %243
    %247 = vset.pattern.permute.xlu0 0
    %248 = vperm.xlu0 %247, %v238
    %v249 = vpop.permute.xlu0 %248
    %252 = vset.pattern.permute.xlu0 0
    %253 = vperm.xlu0 %252, %v239
    %v254 = vpop.permute.xlu0 %253
    %257 = vset.pattern.permute.xlu0 0
    %258 = vperm.xlu0 %257, %v240
    %v259 = vpop.permute.xlu0 %258
    %v261 = vsub.f32 %v88, %v244
    %v262 = vsub.f32 %v92, %v244
    %v263 = vsub.f32 %v96, %v244
    %v264 = vsub.f32 %v100, %v244
    %v265 = vsub.f32 %v88, %v249
    %v266 = vsub.f32 %v92, %v249
    %v267 = vsub.f32 %v96, %v249
    %v268 = vsub.f32 %v100, %v249
    %v269 = vsub.f32 %v88, %v254
    %v270 = vsub.f32 %v92, %v254
    %v271 = vsub.f32 %v96, %v254
    %v272 = vsub.f32 %v100, %v254
    %v273 = vsub.f32 %v88, %v259
    %v274 = vsub.f32 %v92, %v259
    %v275 = vsub.f32 %v96, %v259
    %v276 = vsub.f32 %v100, %v259
    %v277 = vmul.f32 %v261, %v261
    %v278 = vmul.f32 %v262, %v262
    %v279 = vmul.f32 %v263, %v263
    %v280 = vmul.f32 %v264, %v264
    %v281 = vmul.f32 %v265, %v265
    %v282 = vmul.f32 %v266, %v266
    %v283 = vmul.f32 %v267, %v267
    %v284 = vmul.f32 %v268, %v268
    %v285 = vmul.f32 %v269, %v269
    %v286 = vmul.f32 %v270, %v270
    %v287 = vmul.f32 %v271, %v271
    %v288 = vmul.f32 %v272, %v272
    %v289 = vmul.f32 %v273, %v273
    %v290 = vmul.f32 %v274, %v274
    %v291 = vmul.f32 %v275, %v275
    %v292 = vmul.f32 %v276, %v276
    %v293 = vsub.f32 0.0, %v277
    %v294 = vsub.f32 0.0, %v278
    %v295 = vsub.f32 0.0, %v279
    %v296 = vsub.f32 0.0, %v280
    %v297 = vsub.f32 0.0, %v281
    %v298 = vsub.f32 0.0, %v282
    %v299 = vsub.f32 0.0, %v283
    %v300 = vsub.f32 0.0, %v284
    %v301 = vsub.f32 0.0, %v285
    %v302 = vsub.f32 0.0, %v286
    %v303 = vsub.f32 0.0, %v287
    %v304 = vsub.f32 0.0, %v288
    %v305 = vsub.f32 0.0, %v289
    %v306 = vsub.f32 0.0, %v290
    %v307 = vsub.f32 0.0, %v291
    %v308 = vsub.f32 0.0, %v292
    %v309 = vld [vmem:[%s2] sm:$0xff]
    %v310 = vld [vmem:[%s2 + $0x8] sm:$0xff]
    %v311 = vld [vmem:[%s2 + $0x10] sm:$0xff]
    %v312 = vld [vmem:[%s2 + $0x18] sm:$0xff]
    %314 = vset.pattern.permute.xlu0 0
    %315 = vperm.xlu0 %314, %v309
    %v316 = vpop.permute.xlu0 %315
    %319 = vset.pattern.permute.xlu0 0
    %320 = vperm.xlu0 %319, %v310
    %v321 = vpop.permute.xlu0 %320
    %324 = vset.pattern.permute.xlu0 0
    %325 = vperm.xlu0 %324, %v311
    %v326 = vpop.permute.xlu0 %325
    %329 = vset.pattern.permute.xlu0 0
    %330 = vperm.xlu0 %329, %v312
    %v331 = vpop.permute.xlu0 %330
    %v333 = vmul.f32 %v293, %v316
    %v334 = vmul.f32 %v294, %v316
    %v335 = vmul.f32 %v295, %v316
    %v336 = vmul.f32 %v296, %v316
    %v337 = vmul.f32 %v297, %v321
    %v338 = vmul.f32 %v298, %v321
    %v339 = vmul.f32 %v299, %v321
    %v340 = vmul.f32 %v300, %v321
    %v341 = vmul.f32 %v301, %v326
    %v342 = vmul.f32 %v302, %v326
    %v343 = vmul.f32 %v303, %v326
    %v344 = vmul.f32 %v304, %v326
    %v345 = vmul.f32 %v305, %v331
    %v346 = vmul.f32 %v306, %v331
    %v347 = vmul.f32 %v307, %v331
    %v348 = vmul.f32 %v308, %v331
    %v349 = vmul.f32 %v333, 1.442695
    %v350 = vpow.pop %v349
    %v351 = vmul.f32 %v334, 1.442695
    %v352 = vpow.pop %v351
    %v353 = vmul.f32 %v335, 1.442695
    %v354 = vpow.pop %v353
    %v355 = vmul.f32 %v336, 1.442695
    %v356 = vpow.pop %v355
    %v357 = vmul.f32 %v337, 1.442695
    %v358 = vpow.pop %v357
    %v359 = vmul.f32 %v338, 1.442695
    %v360 = vpow.pop %v359
    %v361 = vmul.f32 %v339, 1.442695
    %v362 = vpow.pop %v361
    %v363 = vmul.f32 %v340, 1.442695
    %v364 = vpow.pop %v363
    %v365 = vmul.f32 %v341, 1.442695
    %v366 = vpow.pop %v365
    %v367 = vmul.f32 %v342, 1.442695
    %v368 = vpow.pop %v367
    %v369 = vmul.f32 %v343, 1.442695
    %v370 = vpow.pop %v369
    %v371 = vmul.f32 %v344, 1.442695
    %v372 = vpow.pop %v371
    %v373 = vmul.f32 %v345, 1.442695
    %v374 = vpow.pop %v373
    %v375 = vmul.f32 %v346, 1.442695
    %v376 = vpow.pop %v375
    %v377 = vmul.f32 %v347, 1.442695
    %v378 = vpow.pop %v377
    %v379 = vmul.f32 %v348, 1.442695
    %v380 = vpow.pop %v379
    %v381 = vmul.f32 %v221, %v350
    %v382 = vmul.f32 %v222, %v352
    %v383 = vmul.f32 %v223, %v354
    %v384 = vmul.f32 %v224, %v356
    %v385 = vmul.f32 %v225, %v358
    %v386 = vmul.f32 %v226, %v360
    %v387 = vmul.f32 %v227, %v362
    %v388 = vmul.f32 %v228, %v364
    %v389 = vmul.f32 %v229, %v366
    %v390 = vmul.f32 %v230, %v368
    %v391 = vmul.f32 %v231, %v370
    %v392 = vmul.f32 %v232, %v372
    %v393 = vmul.f32 %v233, %v374
    %v394 = vmul.f32 %v234, %v376
    %v395 = vmul.f32 %v235, %v378
    %v396 = vmul.f32 %v236, %v380
    %v397 = vmul.f32 %v381, 0.5
    %v398 = vmul.f32 %v382, 0.5
    %v399 = vmul.f32 %v383, 0.5
    %v400 = vmul.f32 %v384, 0.5
    %v401 = vmul.f32 %v385, 0.5
    %v402 = vmul.f32 %v386, 0.5
    %v403 = vmul.f32 %v387, 0.5
    %v404 = vmul.f32 %v388, 0.5
    %v405 = vmul.f32 %v389, 0.5
    %v406 = vmul.f32 %v390, 0.5
    %v407 = vmul.f32 %v391, 0.5
    %v408 = vmul.f32 %v392, 0.5
    %v409 = vmul.f32 %v393, 0.5
    %v410 = vmul.f32 %v394, 0.5
    %v411 = vmul.f32 %v395, 0.5
    %v412 = vmul.f32 %v396, 0.5
    %v413 = vtanh.pop %v397
    %v414 = vtanh.pop %v398
    %v415 = vtanh.pop %v399
    %v416 = vtanh.pop %v400
    %v417 = vtanh.pop %v401
    %v418 = vtanh.pop %v402
    %v419 = vtanh.pop %v403
    %v420 = vtanh.pop %v404
    %v421 = vtanh.pop %v405
    %v422 = vtanh.pop %v406
    %v423 = vtanh.pop %v407
    %v424 = vtanh.pop %v408
    %v425 = vtanh.pop %v409
    %v426 = vtanh.pop %v410
    %v427 = vtanh.pop %v411
    %v428 = vtanh.pop %v412
    %v429 = vmul.f32 %v413, 0.5
    %v430 = vmul.f32 %v414, 0.5
    %v431 = vmul.f32 %v415, 0.5
    %v432 = vmul.f32 %v416, 0.5
    %v433 = vmul.f32 %v417, 0.5
    %v434 = vmul.f32 %v418, 0.5
    %v435 = vmul.f32 %v419, 0.5
    %v436 = vmul.f32 %v420, 0.5
    %v437 = vmul.f32 %v421, 0.5
    %v438 = vmul.f32 %v422, 0.5
    %v439 = vmul.f32 %v423, 0.5
    %v440 = vmul.f32 %v424, 0.5
    %v441 = vmul.f32 %v425, 0.5
    %v442 = vmul.f32 %v426, 0.5
    %v443 = vmul.f32 %v427, 0.5
    %v444 = vmul.f32 %v428, 0.5
    %v445 = vadd.f32 %v429, 0.5
    %v446 = vadd.f32 %v430, 0.5
    %v447 = vadd.f32 %v431, 0.5
    %v448 = vadd.f32 %v432, 0.5
    %v449 = vadd.f32 %v433, 0.5
    %v450 = vadd.f32 %v434, 0.5
    %v451 = vadd.f32 %v435, 0.5
    %v452 = vadd.f32 %v436, 0.5
    %v453 = vadd.f32 %v437, 0.5
    %v454 = vadd.f32 %v438, 0.5
    %v455 = vadd.f32 %v439, 0.5
    %v456 = vadd.f32 %v440, 0.5
    %v457 = vadd.f32 %v441, 0.5
    %v458 = vadd.f32 %v442, 0.5
    %v459 = vadd.f32 %v443, 0.5
    %v460 = vadd.f32 %v444, 0.5
    %v461 = vmul.f32 %v381, %v445
    %v462 = vmul.f32 %v382, %v446
    %v463 = vmul.f32 %v383, %v447
    %v464 = vmul.f32 %v384, %v448
    %v465 = vmul.f32 %v385, %v449
    %v466 = vmul.f32 %v386, %v450
    %v467 = vmul.f32 %v387, %v451
    %v468 = vmul.f32 %v388, %v452
    %v469 = vmul.f32 %v389, %v453
    %v470 = vmul.f32 %v390, %v454
    %v471 = vmul.f32 %v391, %v455
    %v472 = vmul.f32 %v392, %v456
    %v473 = vmul.f32 %v393, %v457
    %v474 = vmul.f32 %v394, %v458
    %v475 = vmul.f32 %v395, %v459
    %v476 = vmul.f32 %v396, %v460
    %v477 = vld [vmem:[%s5] sm:$0xff]
    %v478 = vld [vmem:[%s5 + $0x8] sm:$0xff]
    %v479 = vld [vmem:[%s5 + $0x10] sm:$0xff]
    %v480 = vld [vmem:[%s5 + $0x18] sm:$0xff]
    %v481 = vld [vmem:[%s6] sm:$0xff]
    %v482 = vld [vmem:[%s6 + $0x8] sm:$0xff]
    %v483 = vld [vmem:[%s6 + $0x10] sm:$0xff]
    %v484 = vld [vmem:[%s6 + $0x18] sm:$0xff]
    %486 = vset.pattern.permute.xlu0 0
    %487 = vperm.xlu0 %486, %v481
    %v488 = vpop.permute.xlu0 %487
    %491 = vset.pattern.permute.xlu0 0
    %492 = vperm.xlu0 %491, %v482
    %v493 = vpop.permute.xlu0 %492
    %496 = vset.pattern.permute.xlu0 0
    %497 = vperm.xlu0 %496, %v483
    %v498 = vpop.permute.xlu0 %497
    %501 = vset.pattern.permute.xlu0 0
    %502 = vperm.xlu0 %501, %v484
    %v503 = vpop.permute.xlu0 %502
    %vm505 = vcmask 261120
    %v507 = vsel %vm505, %v477, 0
    %v510 = vsel %vm505, %v478, 0
    %v513 = vsel %vm505, %v479, 0
    %v516 = vsel %vm505, %v480, 0
    %518 = vmatprep.subr.mxu0 0.0
    %519 = vmatpush1.msra.mxu0 0.0
    %520 = vmatprep.subr.mxu0 0.0
    %521 = vmatpush1.msra.mxu0 0.0
    %522 = vmatprep.subr.mxu0 0.0
    %523 = vmatpush1.msra.mxu0 0.0
    %524 = vmatprep.subr.mxu0 0.0
    %525 = vmatpush1.msra.mxu0 0.0
    %526 = vmatprep.subr.mxu0 0.0
    %527 = vmatpush1.msra.mxu0 0.0
    %528 = vmatprep.subr.mxu0 0.0
    %529 = vmatpush1.msra.mxu0 0.0
    %530 = vmatprep.subr.mxu0 0.0
    %531 = vmatpush1.msra.mxu0 0.0
    %532 = vmatprep.subr.mxu0 0.0
    %533 = vmatpush1.msra.mxu0 0.0
    %534 = vmatprep.subr.mxu0 0.0
    %535 = vmatpush1.msra.mxu0 0.0
    %536 = vmatprep.subr.mxu0 0.0
    %537 = vmatpush1.msra.mxu0 0.0
    %538 = vmatprep.subr.mxu0 0.0
    %539 = vmatpush1.msra.mxu0 0.0
    %540 = vmatprep.subr.mxu0 0.0
    %541 = vmatpush1.msra.mxu0 0.0
    %542 = vmatprep.subr.mxu0 %v474
    %543 = vmatpush1.msra.mxu0 %v473
    %544 = vmatprep.subr.mxu0 %v470
    %545 = vmatpush1.msra.mxu0 %v469
    %546 = vmatprep.subr.mxu0 %v466
    %547 = vmatpush1.msra.mxu0 %v465
    %548 = vmatprep.subr.mxu0 %v462
    %549 = vmatpush1.msra.mxu0 %v461
    %550 = vmatprep.subr.mxu0 0.0
    %551 = vmatpush2.msra.mxu0 0.0
    %552 = vmatprep.subr.mxu0 0.0
    %553 = vmatpush2.msra.mxu0 0.0
    %554 = vmatprep.subr.mxu0 0.0
    %555 = vmatpush2.msra.mxu0 0.0
    %556 = vmatprep.subr.mxu0 0.0
    %557 = vmatpush2.msra.mxu0 0.0
    %558 = vmatprep.subr.mxu0 0.0
    %559 = vmatpush2.msra.mxu0 0.0
    %560 = vmatprep.subr.mxu0 0.0
    %561 = vmatpush2.msra.mxu0 0.0
    %562 = vmatprep.subr.mxu0 0.0
    %563 = vmatpush2.msra.mxu0 0.0
    %564 = vmatprep.subr.mxu0 0.0
    %565 = vmatpush2.msra.mxu0 0.0
    %566 = vmatprep.subr.mxu0 0.0
    %567 = vmatpush2.msra.mxu0 0.0
    %568 = vmatprep.subr.mxu0 0.0
    %569 = vmatpush2.msra.mxu0 0.0
    %570 = vmatprep.subr.mxu0 0.0
    %571 = vmatpush2.msra.mxu0 0.0
    %572 = vmatprep.subr.mxu0 0.0
    %573 = vmatpush2.msra.mxu0 0.0
    %574 = vmatprep.subr.mxu0 0.0
    %575 = vmatpush2.msra.mxu0 0.0
    %576 = vmatprep.subr.mxu0 0.0
    %577 = vmatpush2.msra.mxu0 0.0
    %578 = vmatprep.subr.mxu0 0.0
    %579 = vmatpush2.msra.mxu0 0.0
    %580 = vmatprep.subr.mxu0 0.0
    %581 = vmatpush2.msra.mxu0 0.0
    %582 = vmatprep.mubr.f32.mxu0 0.0
    %583 = vmatmul.mubr.f32.gmra.mxu0 %v507
    %v584 = vpop.f32.mrf.mxu0
    %v585 = vadd.f32 %v488, %v584
    %v586 = vpop.f32.mrf.mxu0
    %v587 = vadd.f32 %v488, %v586
    %588 = vmatprep.mubr.f32.mxu0 0.0
    %589 = vmatmul.mubr.f32.gmra.mxu0 %v510
    %v590 = vpop.f32.mrf.mxu0
    %v591 = vadd.f32 %v493, %v590
    %v592 = vpop.f32.mrf.mxu0
    %v593 = vadd.f32 %v493, %v592
    %594 = vmatprep.mubr.f32.mxu0 0.0
    %595 = vmatmul.mubr.f32.gmra.mxu0 %v513
    %v596 = vpop.f32.mrf.mxu0
    %v597 = vadd.f32 %v498, %v596
    %v598 = vpop.f32.mrf.mxu0
    %v599 = vadd.f32 %v498, %v598
    %600 = vmatprep.mubr.f32.mxu0 0.0
    %601 = vmatmul.mubr.f32.gmra.mxu0 %v516
    %v602 = vpop.f32.mrf.mxu0
    %v603 = vadd.f32 %v503, %v602
    %v604 = vpop.f32.mrf.mxu0
    %v605 = vadd.f32 %v503, %v604
    %606 = vdwg.mxu0
    %607 = vmatprep.subr.mxu0 0.0
    %608 = vmatpush1.msra.mxu0 0.0
    %609 = vmatprep.subr.mxu0 0.0
    %610 = vmatpush1.msra.mxu0 0.0
    %611 = vmatprep.subr.mxu0 0.0
    %612 = vmatpush1.msra.mxu0 0.0
    %613 = vmatprep.subr.mxu0 0.0
    %614 = vmatpush1.msra.mxu0 0.0
    %615 = vmatprep.subr.mxu0 0.0
    %616 = vmatpush1.msra.mxu0 0.0
    %617 = vmatprep.subr.mxu0 0.0
    %618 = vmatpush1.msra.mxu0 0.0
    %619 = vmatprep.subr.mxu0 0.0
    %620 = vmatpush1.msra.mxu0 0.0
    %621 = vmatprep.subr.mxu0 0.0
    %622 = vmatpush1.msra.mxu0 0.0
    %623 = vmatprep.subr.mxu0 0.0
    %624 = vmatpush1.msra.mxu0 0.0
    %625 = vmatprep.subr.mxu0 0.0
    %626 = vmatpush1.msra.mxu0 0.0
    %627 = vmatprep.subr.mxu0 0.0
    %628 = vmatpush1.msra.mxu0 0.0
    %629 = vmatprep.subr.mxu0 0.0
    %630 = vmatpush1.msra.mxu0 0.0
    %631 = vmatprep.subr.mxu0 %v476
    %632 = vmatpush1.msra.mxu0 %v475
    %633 = vmatprep.subr.mxu0 %v472
    %634 = vmatpush1.msra.mxu0 %v471
    %635 = vmatprep.subr.mxu0 %v468
    %636 = vmatpush1.msra.mxu0 %v467
    %637 = vmatprep.subr.mxu0 %v464
    %638 = vmatpush1.msra.mxu0 %v463
    %639 = vmatprep.subr.mxu0 0.0
    %640 = vmatpush2.msra.mxu0 0.0
    %641 = vmatprep.subr.mxu0 0.0
    %642 = vmatpush2.msra.mxu0 0.0
    %643 = vmatprep.subr.mxu0 0.0
    %644 = vmatpush2.msra.mxu0 0.0
    %645 = vmatprep.subr.mxu0 0.0
    %646 = vmatpush2.msra.mxu0 0.0
    %647 = vmatprep.subr.mxu0 0.0
    %648 = vmatpush2.msra.mxu0 0.0
    %649 = vmatprep.subr.mxu0 0.0
    %650 = vmatpush2.msra.mxu0 0.0
    %651 = vmatprep.subr.mxu0 0.0
    %652 = vmatpush2.msra.mxu0 0.0
    %653 = vmatprep.subr.mxu0 0.0
    %654 = vmatpush2.msra.mxu0 0.0
    %655 = vmatprep.subr.mxu0 0.0
    %656 = vmatpush2.msra.mxu0 0.0
    %657 = vmatprep.subr.mxu0 0.0
    %658 = vmatpush2.msra.mxu0 0.0
    %659 = vmatprep.subr.mxu0 0.0
    %660 = vmatpush2.msra.mxu0 0.0
    %661 = vmatprep.subr.mxu0 0.0
    %662 = vmatpush2.msra.mxu0 0.0
    %663 = vmatprep.subr.mxu0 0.0
    %664 = vmatpush2.msra.mxu0 0.0
    %665 = vmatprep.subr.mxu0 0.0
    %666 = vmatpush2.msra.mxu0 0.0
    %667 = vmatprep.subr.mxu0 0.0
    %668 = vmatpush2.msra.mxu0 0.0
    %669 = vmatprep.subr.mxu0 0.0
    %670 = vmatpush2.msra.mxu0 0.0
    %671 = vmatprep.mubr.f32.mxu0 0.0
    %672 = vmatmul.mubr.f32.gmra.mxu0 %v507
    %v673 = vpop.f32.mrf.mxu0
    %v674 = vadd.f32 %v488, %v673
    %v675 = vpop.f32.mrf.mxu0
    %v676 = vadd.f32 %v488, %v675
    %677 = vmatprep.mubr.f32.mxu0 0.0
    %678 = vmatmul.mubr.f32.gmra.mxu0 %v510
    %v679 = vpop.f32.mrf.mxu0
    %v680 = vadd.f32 %v493, %v679
    %v681 = vpop.f32.mrf.mxu0
    %v682 = vadd.f32 %v493, %v681
    %683 = vmatprep.mubr.f32.mxu0 0.0
    %684 = vmatmul.mubr.f32.gmra.mxu0 %v513
    %v685 = vpop.f32.mrf.mxu0
    %v686 = vadd.f32 %v498, %v685
    %v687 = vpop.f32.mrf.mxu0
    %v688 = vadd.f32 %v498, %v687
    %689 = vmatprep.mubr.f32.mxu0 0.0
    %690 = vmatmul.mubr.f32.gmra.mxu0 %v516
    %v691 = vpop.f32.mrf.mxu0
    %v692 = vadd.f32 %v503, %v691
    %v693 = vpop.f32.mrf.mxu0
    %v694 = vadd.f32 %v503, %v693
    %695 = vdwg.mxu0
    %v696 = vmul.f32 %v585, 0.5
    %v697 = vmul.f32 %v587, 0.5
    %v698 = vmul.f32 %v674, 0.5
    %v699 = vmul.f32 %v676, 0.5
    %v700 = vmul.f32 %v591, 0.5
    %v701 = vmul.f32 %v593, 0.5
    %v702 = vmul.f32 %v680, 0.5
    %v703 = vmul.f32 %v682, 0.5
    %v704 = vmul.f32 %v597, 0.5
    %v705 = vmul.f32 %v599, 0.5
    %v706 = vmul.f32 %v686, 0.5
    %v707 = vmul.f32 %v688, 0.5
    %v708 = vmul.f32 %v603, 0.5
    %v709 = vmul.f32 %v605, 0.5
    %v710 = vmul.f32 %v692, 0.5
    %v711 = vmul.f32 %v694, 0.5
    %v712 = vtanh.pop %v696
    %v713 = vtanh.pop %v697
    %v714 = vtanh.pop %v698
    %v715 = vtanh.pop %v699
    %v716 = vtanh.pop %v700
    %v717 = vtanh.pop %v701
    %v718 = vtanh.pop %v702
    %v719 = vtanh.pop %v703
    %v720 = vtanh.pop %v704
    %v721 = vtanh.pop %v705
    %v722 = vtanh.pop %v706
    %v723 = vtanh.pop %v707
    %v724 = vtanh.pop %v708
    %v725 = vtanh.pop %v709
    %v726 = vtanh.pop %v710
    %v727 = vtanh.pop %v711
    %v728 = vmul.f32 %v712, 0.5
    %v729 = vmul.f32 %v713, 0.5
    %v730 = vmul.f32 %v714, 0.5
    %v731 = vmul.f32 %v715, 0.5
    %v732 = vmul.f32 %v716, 0.5
    %v733 = vmul.f32 %v717, 0.5
    %v734 = vmul.f32 %v718, 0.5
    %v735 = vmul.f32 %v719, 0.5
    %v736 = vmul.f32 %v720, 0.5
    %v737 = vmul.f32 %v721, 0.5
    %v738 = vmul.f32 %v722, 0.5
    %v739 = vmul.f32 %v723, 0.5
    %v740 = vmul.f32 %v724, 0.5
    %v741 = vmul.f32 %v725, 0.5
    %v742 = vmul.f32 %v726, 0.5
    %v743 = vmul.f32 %v727, 0.5
    %v744 = vadd.f32 %v728, 0.5
    %v745 = vadd.f32 %v729, 0.5
    %v746 = vadd.f32 %v730, 0.5
    %v747 = vadd.f32 %v731, 0.5
    %v748 = vadd.f32 %v732, 0.5
    %v749 = vadd.f32 %v733, 0.5
    %v750 = vadd.f32 %v734, 0.5
    %v751 = vadd.f32 %v735, 0.5
    %v752 = vadd.f32 %v736, 0.5
    %v753 = vadd.f32 %v737, 0.5
    %v754 = vadd.f32 %v738, 0.5
    %v755 = vadd.f32 %v739, 0.5
    %v756 = vadd.f32 %v740, 0.5
    %v757 = vadd.f32 %v741, 0.5
    %v758 = vadd.f32 %v742, 0.5
    %v759 = vadd.f32 %v743, 0.5
    %v760 = vmul.f32 %v585, %v744
    %v761 = vmul.f32 %v587, %v745
    %v762 = vmul.f32 %v674, %v746
    %v763 = vmul.f32 %v676, %v747
    %v764 = vmul.f32 %v591, %v748
    %v765 = vmul.f32 %v593, %v749
    %v766 = vmul.f32 %v680, %v750
    %v767 = vmul.f32 %v682, %v751
    %v768 = vmul.f32 %v597, %v752
    %v769 = vmul.f32 %v599, %v753
    %v770 = vmul.f32 %v686, %v754
    %v771 = vmul.f32 %v688, %v755
    %v772 = vmul.f32 %v603, %v756
    %v773 = vmul.f32 %v605, %v757
    %v774 = vmul.f32 %v692, %v758
    %v775 = vmul.f32 %v694, %v759
    %v776 = vld [vmem:[%s7] sm:$0x1]
    %v777 = vld [vmem:[#allocation2] sm:$0x1]
    %779 = vset.pattern.permute.xlu0 0
    %780 = vperm.xlu0 %779, %v777
    %v781 = vpop.permute.xlu0 %780
    %v783 = vlaneseq
    %v784 = vshrl.u32 %v783, 7
    %v785 = vsub.s32 0, %v784
    %v786 = vrot.slane %v781, %v785
    %v788 = vsel %vm505, %v776, 0
    %790 = vmatprep.subr.mxu0 0.0
    %791 = vmatpush1.msra.mxu0 0.0
    %792 = vmatprep.subr.mxu0 0.0
    %793 = vmatpush1.msra.mxu0 0.0
    %794 = vmatprep.subr.mxu0 0.0
    %795 = vmatpush1.msra.mxu0 0.0
    %796 = vmatprep.subr.mxu0 0.0
    %797 = vmatpush1.msra.mxu0 0.0
    %798 = vmatprep.subr.mxu0 0.0
    %799 = vmatpush1.msra.mxu0 0.0
    %800 = vmatprep.subr.mxu0 0.0
    %801 = vmatpush1.msra.mxu0 0.0
    %802 = vmatprep.subr.mxu0 0.0
    %803 = vmatpush1.msra.mxu0 0.0
    %804 = vmatprep.subr.mxu0 0.0
    %805 = vmatpush1.msra.mxu0 0.0
    %806 = vmatprep.subr.mxu0 0.0
    %807 = vmatpush1.msra.mxu0 0.0
    %808 = vmatprep.subr.mxu0 0.0
    %809 = vmatpush1.msra.mxu0 0.0
    %810 = vmatprep.subr.mxu0 0.0
    %811 = vmatpush1.msra.mxu0 0.0
    %812 = vmatprep.subr.mxu0 0.0
    %813 = vmatpush1.msra.mxu0 0.0
    %814 = vmatprep.subr.mxu0 %v773
    %815 = vmatpush1.msra.mxu0 %v772
    %816 = vmatprep.subr.mxu0 %v769
    %817 = vmatpush1.msra.mxu0 %v768
    %818 = vmatprep.subr.mxu0 %v765
    %819 = vmatpush1.msra.mxu0 %v764
    %820 = vmatprep.subr.mxu0 %v761
    %821 = vmatpush1.msra.mxu0 %v760
    %822 = vmatprep.subr.mxu0 0.0
    %823 = vmatpush2.msra.mxu0 0.0
    %824 = vmatprep.subr.mxu0 0.0
    %825 = vmatpush2.msra.mxu0 0.0
    %826 = vmatprep.subr.mxu0 0.0
    %827 = vmatpush2.msra.mxu0 0.0
    %828 = vmatprep.subr.mxu0 0.0
    %829 = vmatpush2.msra.mxu0 0.0
    %830 = vmatprep.subr.mxu0 0.0
    %831 = vmatpush2.msra.mxu0 0.0
    %832 = vmatprep.subr.mxu0 0.0
    %833 = vmatpush2.msra.mxu0 0.0
    %834 = vmatprep.subr.mxu0 0.0
    %835 = vmatpush2.msra.mxu0 0.0
    %836 = vmatprep.subr.mxu0 0.0
    %837 = vmatpush2.msra.mxu0 0.0
    %838 = vmatprep.subr.mxu0 0.0
    %839 = vmatpush2.msra.mxu0 0.0
    %840 = vmatprep.subr.mxu0 0.0
    %841 = vmatpush2.msra.mxu0 0.0
    %842 = vmatprep.subr.mxu0 0.0
    %843 = vmatpush2.msra.mxu0 0.0
    %844 = vmatprep.subr.mxu0 0.0
    %845 = vmatpush2.msra.mxu0 0.0
    %846 = vmatprep.subr.mxu0 0.0
    %847 = vmatpush2.msra.mxu0 0.0
    %848 = vmatprep.subr.mxu0 0.0
    %849 = vmatpush2.msra.mxu0 0.0
    %850 = vmatprep.subr.mxu0 0.0
    %851 = vmatpush2.msra.mxu0 0.0
    %852 = vmatprep.subr.mxu0 0.0
    %853 = vmatpush2.msra.mxu0 0.0
    %854 = vmatprep.mubr.f32.mxu0 0.0
    %855 = vmatmul.mubr.f32.gmra.mxu0 %v788
    %v856 = vpop.f32.mrf.mxu0
    %v857 = vadd.f32 %v786, %v856
    %v858 = vpop.f32.mrf.mxu0
    %v859 = vadd.f32 %v786, %v858
    %860 = vdwg.mxu0
    %861 = vmatprep.subr.mxu0 0.0
    %862 = vmatpush1.msra.mxu0 0.0
    %863 = vmatprep.subr.mxu0 0.0
    %864 = vmatpush1.msra.mxu0 0.0
    %865 = vmatprep.subr.mxu0 0.0
    %866 = vmatpush1.msra.mxu0 0.0
    %867 = vmatprep.subr.mxu0 0.0
    %868 = vmatpush1.msra.mxu0 0.0
    %869 = vmatprep.subr.mxu0 0.0
    %870 = vmatpush1.msra.mxu0 0.0
    %871 = vmatprep.subr.mxu0 0.0
    %872 = vmatpush1.msra.mxu0 0.0
    %873 = vmatprep.subr.mxu0 0.0
    %874 = vmatpush1.msra.mxu0 0.0
    %875 = vmatprep.subr.mxu0 0.0
    %876 = vmatpush1.msra.mxu0 0.0
    %877 = vmatprep.subr.mxu0 0.0
    %878 = vmatpush1.msra.mxu0 0.0
    %879 = vmatprep.subr.mxu0 0.0
    %880 = vmatpush1.msra.mxu0 0.0
    %881 = vmatprep.subr.mxu0 0.0
    %882 = vmatpush1.msra.mxu0 0.0
    %883 = vmatprep.subr.mxu0 0.0
    %884 = vmatpush1.msra.mxu0 0.0
    %885 = vmatprep.subr.mxu0 %v775
    %886 = vmatpush1.msra.mxu0 %v774
    %887 = vmatprep.subr.mxu0 %v771
    %888 = vmatpush1.msra.mxu0 %v770
    %889 = vmatprep.subr.mxu0 %v767
    %890 = vmatpush1.msra.mxu0 %v766
    %891 = vmatprep.subr.mxu0 %v763
    %892 = vmatpush1.msra.mxu0 %v762
    %893 = vmatprep.subr.mxu0 0.0
    %894 = vmatpush2.msra.mxu0 0.0
    %895 = vmatprep.subr.mxu0 0.0
    %896 = vmatpush2.msra.mxu0 0.0
    %897 = vmatprep.subr.mxu0 0.0
    %898 = vmatpush2.msra.mxu0 0.0
    %899 = vmatprep.subr.mxu0 0.0
    %900 = vmatpush2.msra.mxu0 0.0
    %901 = vmatprep.subr.mxu0 0.0
    %902 = vmatpush2.msra.mxu0 0.0
    %903 = vmatprep.subr.mxu0 0.0
    %904 = vmatpush2.msra.mxu0 0.0
    %905 = vmatprep.subr.mxu0 0.0
    %906 = vmatpush2.msra.mxu0 0.0
    %907 = vmatprep.subr.mxu0 0.0
    %908 = vmatpush2.msra.mxu0 0.0
    %909 = vmatprep.subr.mxu0 0.0
    %910 = vmatpush2.msra.mxu0 0.0
    %911 = vmatprep.subr.mxu0 0.0
    %912 = vmatpush2.msra.mxu0 0.0
    %913 = vmatprep.subr.mxu0 0.0
    %914 = vmatpush2.msra.mxu0 0.0
    %915 = vmatprep.subr.mxu0 0.0
    %916 = vmatpush2.msra.mxu0 0.0
    %917 = vmatprep.subr.mxu0 0.0
    %918 = vmatpush2.msra.mxu0 0.0
    %919 = vmatprep.subr.mxu0 0.0
    %920 = vmatpush2.msra.mxu0 0.0
    %921 = vmatprep.subr.mxu0 0.0
    %922 = vmatpush2.msra.mxu0 0.0
    %923 = vmatprep.subr.mxu0 0.0
    %924 = vmatpush2.msra.mxu0 0.0
    %925 = vmatprep.mubr.f32.mxu0 0.0
    %926 = vmatmul.mubr.f32.gmra.mxu0 %v788
    %v927 = vpop.f32.mrf.mxu0
    %v928 = vadd.f32 %v786, %v927
    %v929 = vpop.f32.mrf.mxu0
    %v930 = vadd.f32 %v786, %v929
    %931 = vdwg.mxu0
    %v936 = vcombine.low %v857, %v859
    %v937 = vcombine.low %v928, %v930
    %v939 = vunpack.c.l.s4 1966171168
    %v940 = vunpack.c.0.s8 %v939
    %v941 = vlaneseq
    %v942 = vshrl.u32 %v941, 7
    %v943 = vsub.s32 %v940, %v942
    %v944 = vrot.slane %v936, %v943
    %v946 = vunpack.c.l.s4 1966171168
    %v947 = vunpack.c.0.s8 %v946
    %v948 = vlaneseq
    %v949 = vshrl.u32 %v948, 7
    %v950 = vsub.s32 %v947, %v949
    %v951 = vrot.slane %v937, %v950
    %v952 = vcombine.low %v944, %v951
    %v954 = vunpack.c.l.s4 1966171168
    %v955 = vunpack.c.0.s8 %v954
    %v956 = vlaneseq
    %v957 = vshrl.u32 %v956, 7
    %v958 = vsub.s32 %v955, %v957
    %v959 = vrot.slane %v952, %v958
    %v961 = vlaneseq
    %vm962 = vcmp.ge.s32.totalorder %v961, 0
    %vm963 = vcmp.lt.s32.totalorder %v961, 512
    %vm964 = vmand %vm962, %vm963
    %965 = vst.msk [vmem:[#allocation3] sm:$0xf] %vm964, %v959
    // Predicated region
    $region38: #{tpu_custom_call.1} parent=1 // pred_check
      _
    $region39: #{tpu_custom_call.1} parent=1 // pred_check_branch
      %967 = sbr.rel (0) target = $region41
    $region40: #{tpu_custom_call.1} parent=1 // pred_region
      %s969 = ssub.s32 64, 16
      %970 = vsyncadd [#allocation4], %s969
      %s972 = sshll.u32 [#allocation3], 4
      %s973 = int_to_ptr.vmem [resolvable:$true] %s972
      %975 = dma.vmem_to_hbm [thread:$0]  %s973, 16, %s9, [#allocation4]
    $region41: #{tpu_custom_call.1} parent=1 // pred_fallthru
      _
    // Predicated region
    $region42: #{tpu_custom_call.1} parent=1 // pred_check
      _
    $region43: #{tpu_custom_call.1} parent=1 // pred_check_branch
      %977 = sbr.rel (0) target = $region45
    $region44: #{tpu_custom_call.1} parent=1 // pred_region
      %978 = dma.done [#allocation4], 64
    $region45: #{tpu_custom_call.1} parent=1 // pred_fallthru
      _
    %979 = vsyncpa [#allocation4], 1

</llo_original>
